<compile_context>
chip_gen: v6e
topology: v6e:2x2x1
jax: 0.10.0
libtpu: 0.0.40
codegen_flags: <defaults>
</compile_context>

<pallas_src>
import functools
import math

import jax
import jax.numpy as jnp
from jax import lax
from jax.experimental import pallas as pl
from jax.experimental.pallas import tpu as pltpu

_LANE = 128
_SUBLANE = 8
_MAX_BLOCK_ELEMS = 256 * 1024   # ~1 MiB of f32 per block (per array)
_SPLIT_ELEMS = 64 * 1024        # split single-step grids above this (megacore)


def _zero_softmax_kernel(x_ref, o_ref, *, eps, axis):
    """(exp(x)-1)^2 normalized along `axis`; the block holds the full axis."""
    x = x_ref[...].astype(jnp.float32)            # f32 compute even for bf16 in
    e = jnp.exp(x) - 1.0                          # EUP exp + VPU sub
    x_exp = e * e                                 # VPU
    s = jnp.sum(x_exp, axis=axis, keepdims=True)  # f32 accumulation
    inv = 1.0 / (s + eps)                         # exact, one per output column
    o_ref[...] = (x_exp * inv).astype(o_ref.dtype)


def _zero_softmax_packed_kernel(x_ref, o_ref, *, eps, r):
    """Last-axis reduce with r | 128: each 128-lane row holds 128//r groups.

    Per-group sums are computed with one block-diagonal (128,128) f32 matmul
    (the MXU is otherwise idle here), keeping all loads/stores lane-dense.
    """
    x = x_ref[...].astype(jnp.float32)
    e = jnp.exp(x) - 1.0
    x_exp = e * e
    lanes = x_ref.shape[-1]
    gi = lax.broadcasted_iota(jnp.int32, (lanes, lanes), 0) // r
    gj = lax.broadcasted_iota(jnp.int32, (lanes, lanes), 1) // r
    seg = (gi == gj).astype(jnp.float32)          # block-diagonal ones matrix
    s = jnp.dot(x_exp, seg, preferred_element_type=jnp.float32,
                precision=lax.Precision.HIGHEST)  # per-lane group sum, ~f32 exact
    o_ref[...] = (x_exp / (s + eps)).astype(o_ref.dtype)


def _pick_tile(total, quantum, max_tile):
    """Tile along an axis of length `total`.

    Returns `total` when it fits (a full-extent block dim is always legal).
    Otherwise the largest multiple of `quantum` <= max_tile, preferring an
    exact divisor of `total` unless that divisor is < half the cap (a tiny
    divisor tanks HBM efficiency; a ragged tail block is cheaper).
    """
    if total <= max(quantum, max_tile):
        return total
    cap = max(quantum, (max_tile // quantum) * quantum)
    if total % quantum == 0:
        t = cap
        while t > quantum and total % t != 0:
            t -= quantum
        if 2 * t >= cap:
            return t
    return cap  # ragged last block handled by the cdiv grid


def _vmem_limit_bytes(block_elems, itemsize):
    """Scoped VMEM limit: double-buffered in+out blocks + f32 temps + headroom,
    capped at half the physical per-core VMEM of the current generation."""
    need = 4 * block_elems * itemsize + 4 * block_elems * 4 + (2 << 20)
    try:
        cap = int(pltpu.get_tpu_info().vmem_capacity_bytes) // 2
    except Exception:
        cap = 32 << 20  # conservative: safe even on v7x (64 MiB physical)
    return int(min(cap, max(16 << 20, need)))


def zero_softmax(x, dim=0, eps=1e-05):
    """Pallas ZeroSoftmax matching the PyTorch module's forward."""
    orig_shape = x.shape
    ndim = x.ndim
    dim = dim % ndim
    r = orig_shape[dim]
    pre = math.prod(orig_shape[:dim])
    post = math.prod(orig_shape[dim + 1:])
    itemsize = jnp.dtype(x.dtype).itemsize

    if dim == ndim - 1:
        rows = pre
        k = _LANE // r if (0 < r < _LANE and _LANE % r == 0) else 0
        if k and rows % k == 0 and rows // k > 0:
            # ---- lane-dense packed path: k rows of length r per 128 lanes ----
            prows = rows // k
            x_in = x.reshape(prows, _LANE)
            tile_rows = _pick_tile(prows, _SUBLANE,
                                   max(_SUBLANE, _MAX_BLOCK_ELEMS // _LANE))
            if (tile_rows == prows and prows >= 2 * _SUBLANE
                    and tile_rows * _LANE >= _SPLIT_ELEMS):
                tile_rows = ((prows // 2 + _SUBLANE - 1) // _SUBLANE) * _SUBLANE
            grid = (pl.cdiv(prows, tile_rows),)
            block = (tile_rows, _LANE)
            index_map = lambda i: (i, 0)
            kernel = functools.partial(_zero_softmax_packed_kernel, eps=eps, r=r)
            block_elems = tile_rows * _LANE
            semantics = ("parallel",)
            out_shape2 = (prows, _LANE)
        else:
            # ---- plain last-axis reduce: (rows, r) -------------------------
            x_in = x.reshape(rows, r)
            tile_rows = _pick_tile(rows, _SUBLANE,
                                   max(_SUBLANE, _MAX_BLOCK_ELEMS // max(1, r)))
            if (tile_rows == rows and rows >= 2 * _SUBLANE
                    and tile_rows * r >= _SPLIT_ELEMS):
                tile_rows = ((rows // 2 + _SUBLANE - 1) // _SUBLANE) * _SUBLANE
            grid = (pl.cdiv(rows, tile_rows),)
            block = (tile_rows, r)
            index_map = lambda i: (i, 0)
            kernel = functools.partial(_zero_softmax_kernel, eps=eps, axis=-1)
            block_elems = tile_rows * r
            semantics = ("parallel",)
            out_shape2 = (rows, r)
    elif post % _LANE == 0:
        # ---- dense-slab layout: (pre, r, post//128, 128) ---------------------
        # Reduction over axis 1 = r-way VPU add on full (8,128) vregs; no
        # sublane waste even when r < 8.
        n_slabs = post // _LANE
        x_in = x.reshape(pre, r, n_slabs, _LANE)
        col_elems = r * _LANE
        tile_slab = _pick_tile(n_slabs, _SUBLANE,
                               max(_SUBLANE, _MAX_BLOCK_ELEMS // col_elems))
        slice_elems = r * tile_slab * _LANE
        tile_pre = max(1, min(pre, _MAX_BLOCK_ELEMS // max(1, slice_elems)))
        if (tile_pre == pre and tile_slab == n_slabs
                and pre * slice_elems >= _SPLIT_ELEMS):
            if pre >= 2:
                tile_pre = -(-pre // 2)
            elif tile_slab >= 2 * _SUBLANE:
                tile_slab = ((tile_slab // 2 + _SUBLANE - 1) // _SUBLANE) * _SUBLANE
        grid = (pl.cdiv(pre, tile_pre), pl.cdiv(n_slabs, tile_slab))
        block = (tile_pre, r, tile_slab, _LANE)
        index_map = lambda i, j: (i, 0, j, 0)
        kernel = functools.partial(_zero_softmax_kernel, eps=eps, axis=1)
        block_elems = tile_pre * r * tile_slab * _LANE
        semantics = ("parallel", "parallel")
        out_shape2 = (pre, r, n_slabs, _LANE)
    else:
        # ---- generic (pre, r, post) layout, lane tile over post -------------
        x_in = x.reshape(pre, r, post)
        tile_post = _pick_tile(post, _LANE,
                               max(_LANE, _MAX_BLOCK_ELEMS // max(1, r)))
        slice_elems = r * tile_post
        tile_pre = max(1, min(pre, _MAX_BLOCK_ELEMS // max(1, slice_elems)))
        if (tile_pre == pre and tile_post == post
                and pre * slice_elems >= _SPLIT_ELEMS):
            if pre >= 2:
                tile_pre = -(-pre // 2)
            elif tile_post >= 2 * _LANE:
                tile_post = ((tile_post // 2 + _LANE - 1) // _LANE) * _LANE
        grid = (pl.cdiv(pre, tile_pre), pl.cdiv(post, tile_post))
        block = (tile_pre, r, tile_post)
        index_map = lambda i, j: (i, 0, j)
        kernel = functools.partial(_zero_softmax_kernel, eps=eps, axis=1)
        block_elems = tile_pre * r * tile_post
        semantics = ("parallel", "parallel")
        out_shape2 = (pre, r, post)

    out = pl.pallas_call(
        kernel,
        out_shape=jax.ShapeDtypeStruct(out_shape2, x.dtype),
        grid_spec=pltpu.PrefetchScalarGridSpec(
            num_scalar_prefetch=0,
            grid=grid,
            in_specs=[pl.BlockSpec(block, index_map)],
            out_specs=pl.BlockSpec(block, index_map),
        ),
        compiler_params=pltpu.CompilerParams(
            dimension_semantics=semantics,
            vmem_limit_bytes=_vmem_limit_bytes(block_elems, itemsize),
        ),
    )(x_in)

    # Pure reshape back (no transpose, no extra HBM pass).
    return out.reshape(orig_shape)


def zero_softmax_ref(x, dim=0, eps=1e-05):
    x_exp = jnp.square(jnp.exp(x) - 1.0)
    return x_exp / (jnp.sum(x_exp, axis=dim, keepdims=True) + eps)


if __name__ == "__main__":
    key = jax.random.PRNGKey(0)
    # NCHW-style input, same convention as the PyTorch module would receive.
    x = jax.random.normal(key, (2, 4, 16, 16), dtype=jnp.float32)

    # Default dim=0 (slab path: r=2 folded into full (8,128) vregs).
    out = jax.block_until_ready(zero_softmax(x, dim=0, eps=1e-05))
    ref = zero_softmax_ref(x, dim=0, eps=1e-05)
    assert out.shape == x.shape
    assert jnp.allclose(out, ref, atol=1e-6, rtol=1e-4), "mismatch (dim=0)"

    # Last-axis reduce hitting the lane-dense packed path (r=16 divides 128).
    out_last = jax.block_until_ready(zero_softmax(x, dim=-1, eps=1e-05))
    assert jnp.allclose(out_last, zero_softmax_ref(x, dim=-1),
                        atol=1e-6, rtol=1e-4), "mismatch (dim=-1 packed)"

    # Non-128-multiple trailing dims: generic path and unpacked last-axis path.
    y = jax.random.normal(jax.random.PRNGKey(1), (4, 8, 96), dtype=jnp.float32)
    out_mid = jax.block_until_ready(zero_softmax(y, dim=1, eps=1e-05))
    assert jnp.allclose(out_mid, zero_softmax_ref(y, dim=1),
                        atol=1e-6, rtol=1e-4), "mismatch (dim=1 generic)"

    out_last2 = jax.block_until_ready(zero_softmax(y, dim=-1, eps=1e-05))
    assert jnp.allclose(out_last2, zero_softmax_ref(y, dim=-1),
                        atol=1e-6, rtol=1e-4), "mismatch (dim=-1 unpacked)"

    print("KERNEL_OK")
</pallas_src>

<mosaic_0001>
module attributes {stable_mosaic.version = 11 : i64} {
  func.func @_zero_softmax_kernel(%arg0: i32, %arg1: i32, %arg2: memref<1x2x8x128xf32, #tpu.memory_space<vmem>>, %arg3: memref<1x2x8x128xf32, #tpu.memory_space<vmem>>) attributes {dimension_semantics = [#tpu.dimension_semantics<parallel>, #tpu.dimension_semantics<parallel>], iteration_bounds = array<i64: 1, 1>, scalar_prefetch = 0 : i64, scratch_operands = 0 : i64, tpu.core_type = #tpu.core_type<tc>, window_params = [{transform_indices = @transform_0, window_bounds = array<i64: 1, 2, 8, 128>}, {transform_indices = @transform_1, window_bounds = array<i64: 1, 2, 8, 128>}]} {
    %c0 = arith.constant 0 : index
    %c0_0 = arith.constant 0 : index
    %c0_1 = arith.constant 0 : index
    %c0_2 = arith.constant 0 : index
    %0 = vector.load %arg2[%c0, %c0_0, %c0_1, %c0_2] : memref<1x2x8x128xf32, #tpu.memory_space<vmem>>, vector<1x2x8x128xf32>
    %1 = math.exp %0 : vector<1x2x8x128xf32>
    %cst = arith.constant 1.000000e+00 : f32
    %2 = vector.broadcast %cst : f32 to vector<1x2x8x128xf32>
    %3 = arith.subf %1, %2 : vector<1x2x8x128xf32>
    %4 = arith.mulf %3, %3 : vector<1x2x8x128xf32>
    %cst_3 = arith.constant dense<0.000000e+00> : vector<1x8x128xf32>
    %5 = vector.multi_reduction <add>, %4, %cst_3 [1] : vector<1x2x8x128xf32> to vector<1x8x128xf32>
    %6 = vector.shape_cast %5 : vector<1x8x128xf32> to vector<1x1x8x128xf32>
    %cst_4 = arith.constant 9.99999974E-6 : f32
    %7 = vector.broadcast %cst_4 : f32 to vector<1x1x8x128xf32>
    %8 = arith.addf %6, %7 : vector<1x1x8x128xf32>
    %cst_5 = arith.constant 1.000000e+00 : f32
    %9 = vector.broadcast %cst_5 : f32 to vector<1x1x8x128xf32>
    %10 = arith.divf %9, %8 : vector<1x1x8x128xf32>
    %11 = vector.broadcast %10 : vector<1x1x8x128xf32> to vector<1x2x8x128xf32>
    %12 = arith.mulf %4, %11 : vector<1x2x8x128xf32>
    %c0_6 = arith.constant 0 : index
    %c0_7 = arith.constant 0 : index
    %c0_8 = arith.constant 0 : index
    %c0_9 = arith.constant 0 : index
    %13 = vector.load %arg3[%c0_6, %c0_7, %c0_8, %c0_9] : memref<1x2x8x128xf32, #tpu.memory_space<vmem>>, vector<1x2x8x128xf32>
    tpu.vector_store %arg3[%c0_6, %c0_7, %c0_8, %c0_9], %12 {strides = array<i32>} : memref<1x2x8x128xf32, #tpu.memory_space<vmem>>, vector<1x2x8x128xf32>,
    return
  }
  func.func @transform_0(%arg0: i32, %arg1: i32) -> (i32, i32, i32, i32) {
    %c0_i32 = arith.constant 0 : i32
    %c0_i32_0 = arith.constant 0 : i32
    %c0_i32_1 = arith.constant 0 : i32
    return %arg0, %c0_i32, %arg1, %c0_i32_0 : i32, i32, i32, i32
  }
  func.func @transform_1(%arg0: i32, %arg1: i32) -> (i32, i32, i32, i32) {
    %c0_i32 = arith.constant 0 : i32
    %c0_i32_0 = arith.constant 0 : i32
    %c0_i32_1 = arith.constant 0 : i32
    return %arg0, %c0_i32, %arg1, %c0_i32_0 : i32, i32, i32, i32
  }
}

</mosaic_0001>

<llo_original>
// kernel: tpu_custom_call.1
$region0: #{tpu_custom_call.1}
  #allocation0 [shape = 'u32[]', space=smem, size = 0x4, offset = 0x4, fixed_abs, tag = 'smem constant byte address 0x4 - core index']
  #allocation1 [shape = 'u32[144,128]{1,0:T(1,128)}', space=vmem, size = 0x12000, scoped, tag = 'internal scratch']
  %s0 = inlined_call_operand.hbm [shape: f32[1,2,8,128], index: 0, kind: input, shape index: {}]
  %s1 = inlined_call_operand.hbm [shape: f32[1,2,8,128], index: 1, kind: output, shape index: {}]
  %s2 = sld [smem:[#allocation0]]
  $region18: #{tpu_custom_call.1} parent=0
    _
  %s4 = ssub.s32 1, %s2
  %s5 = scalar_select 0, %s4, %s2
  $region1: #{tpu_custom_call.1} parent=0
    #allocation2 [shape = 'u8[8192]{0}', space=vmem, size = 0x2000, scoped, tag = 'input window, operand 0, single buffered']
    #allocation3 [shape = 's32[1]{0}', space=sflag, size = 0x4, scoped, tag = 'scoped memory for tpu_custom_call.1']
    #allocation4 [shape = 's32[1]{0}', space=sflag, size = 0x4, scoped, tag = 'scoped memory for tpu_custom_call.1']
    #allocation5 [shape = 'u8[8192]{0}', space=vmem, size = 0x2000, scoped, tag = 'output window, operand 0, single buffered']
    %6 = vsyncpa [#allocation3], 0
    %7 = vsyncpa [#allocation4], 0
    // Predicated region
    $region2: #{tpu_custom_call.1} parent=1 // pred_check
      _
    $region3: #{tpu_custom_call.1} parent=1 // pred_check_branch
      %9 = sbr.rel (0) target = $region5
    $region4: #{tpu_custom_call.1} parent=1 // pred_region
      %s11 = ssub.s32 256, 256
      %12 = vsyncadd [#allocation3], %s11
      %s13 = sshll.u32 [#allocation2], 4
      %s14 = int_to_ptr.vmem [resolvable:$true] %s13
      %19 = dma.hbm_to_vmem [thread:$0]  %s0, 256, %s14, [#allocation3], 128, 128, 8
    $region5: #{tpu_custom_call.1} parent=1 // pred_fallthru
      _
    // Predicated region
    $region6: #{tpu_custom_call.1} parent=1 // pred_check
      _
    $region7: #{tpu_custom_call.1} parent=1 // pred_check_branch
      %21 = sbr.rel (0) target = $region9
    $region8: #{tpu_custom_call.1} parent=1 // pred_region
      %22 = dma.done [#allocation3], 256
    $region9: #{tpu_custom_call.1} parent=1 // pred_fallthru
      _
    %v23 = vld [vmem:[#allocation2] sm:$0xff]
    %v24 = vld [vmem:[#allocation2 + $0x8] sm:$0xff]
    %v25 = vmul.f32 %v23, 1.442695
    %v26 = vpow.pop %v25
    %v27 = vmul.f32 %v24, 1.442695
    %v28 = vpow.pop %v27
    %v29 = vsub.f32 %v26, 1.0
    %v30 = vsub.f32 %v28, 1.0
    %v31 = vmul.f32 %v29, %v29
    %v32 = vmul.f32 %v30, %v30
    %v33 = vadd.f32 %v31, %v32
    %v34 = vadd.f32 %v33, 1e-05
    %v35 = vrcp.pop %v34
    %v36 = vmul.f32 1.0, %v35
    %v37 = vmul.f32 %v31, %v36
    %v38 = vmul.f32 %v32, %v36
    %39 = vst [vmem:[#allocation5] sm:$0xff] %v37
    %40 = vst [vmem:[#allocation5 + $0x8] sm:$0xff] %v38
    // Predicated region
    $region10: #{tpu_custom_call.1} parent=1 // pred_check
      _
    $region11: #{tpu_custom_call.1} parent=1 // pred_check_branch
      %42 = sbr.rel (0) target = $region13
    $region12: #{tpu_custom_call.1} parent=1 // pred_region
      %s44 = ssub.s32 256, 256
      %45 = vsyncadd [#allocation4], %s44
      %s46 = sshll.u32 [#allocation5], 4
      %s47 = int_to_ptr.vmem [resolvable:$true] %s46
      %52 = dma.vmem_to_hbm [thread:$0]  %s47, 256, %s1, [#allocation4], 128, 128, 8
    $region13: #{tpu_custom_call.1} parent=1 // pred_fallthru
      _
    // Predicated region
    $region14: #{tpu_custom_call.1} parent=1 // pred_check
      _
    $region15: #{tpu_custom_call.1} parent=1 // pred_check_branch
      %54 = sbr.rel (0) target = $region17
    $region16: #{tpu_custom_call.1} parent=1 // pred_region
      %55 = dma.done [#allocation4], 256
    $region17: #{tpu_custom_call.1} parent=1 // pred_fallthru
      _
    %56 = vsyncpa [#allocation3], 1
    %57 = vsyncpa [#allocation4], 1

</llo_original>
